<compile_context>
chip_gen: v7x
topology: tpu7x:2x2x1
jax: 0.10.0
libtpu: 0.0.40
codegen_flags: <defaults>
</compile_context>

<pallas_src>
import functools

import jax
import jax.numpy as jnp
from jax.experimental import pallas as pl
from jax.experimental.pallas import tpu as pltpu


def _round_up(n, m):
    return (n + m - 1) // m * m


# ---------------------------------------------------------------------------
# Kernel: trunk matmul + fused stream matmul + folded dueling head matmul.
# ---------------------------------------------------------------------------

def dueling_kernel(x_ref, w1_ref, b1_ref, wc_ref, bc_ref, wq_ref, bq_ref,
                   o_ref):
    # Trunk: relu(x @ W1 + b1).  bf16 operands, f32 accumulation.
    h = jnp.dot(x_ref[...], w1_ref[...], preferred_element_type=jnp.float32)
    h = jnp.maximum(h + b1_ref[...], 0.0)

    # Fused value/advantage hidden layer: relu(h @ [Wvh | Wah] + [bvh | bah]).
    hc = jnp.dot(h.astype(wc_ref.dtype), wc_ref[...],
                 preferred_element_type=jnp.float32)
    hc = jnp.maximum(hc + bc_ref[...], 0.0)

    # Folded dueling head: q = hc @ Wq + bq  (aggregation already baked into
    # Wq / bq, so no post-matmul reductions are needed).
    q = jnp.dot(hc.astype(wq_ref.dtype), wq_ref[...],
                preferred_element_type=jnp.float32)
    o_ref[...] = (q + bq_ref[...]).astype(o_ref.dtype)


# ---------------------------------------------------------------------------
# Wrapper
# ---------------------------------------------------------------------------

@jax.jit
def dueling_mlp(x, w1, b1, wc, bc, wq, bq):
    B, D = x.shape
    A = wq.shape[1]

    # bf16 MXU operands (halves input DMA bytes, native MXU dtype on
    # v6e/v7x); biases and all elementwise math stay f32.
    xb = x.astype(jnp.bfloat16)
    w1b = w1.astype(jnp.bfloat16)
    wcb = wc.astype(jnp.bfloat16)
    wqb = wq.astype(jnp.bfloat16)

    # Batch tiling: stream x/out over the grid, keep weights VMEM-resident.
    # For small/medium B, target ~2 grid steps so the "parallel" axis shards
    # across both v7x TensorCores; cap at 512 rows (per-step overhead
    # amortized, VMEM < 2 MiB double-buffered).
    TB_MAX = 512
    if B <= TB_MAX:
        TB = max(8, _round_up((B + 1) // 2, 8))
    else:
        TB = TB_MAX
    grid = (pl.cdiv(B, TB),)          # ragged last block handled by Pallas

    const2 = lambda i: (0, 0)         # weights/biases: same block every step

    out = pl.pallas_call(
        dueling_kernel,
        out_shape=jax.ShapeDtypeStruct((B, A), jnp.float32),
        grid=grid,
        in_specs=[
            pl.BlockSpec((TB, D), lambda i: (i, 0)),   # x: tiled over batch
            pl.BlockSpec(w1.shape, const2),
            pl.BlockSpec(b1.shape, const2),
            pl.BlockSpec(wc.shape, const2),
            pl.BlockSpec(bc.shape, const2),
            pl.BlockSpec(wq.shape, const2),
            pl.BlockSpec(bq.shape, const2),
        ],
        out_specs=pl.BlockSpec((TB, A), lambda i: (i, 0)),
        compiler_params=pltpu.CompilerParams(
            dimension_semantics=("parallel",)),        # shard batch across TCs
    )(xb, w1b, b1, wcb, bc, wqb, bq)

    return out


# ---------------------------------------------------------------------------
# Parameter construction / packing (host-side, outside the kernel)
# ---------------------------------------------------------------------------

def xavier_uniform(key, fan_in, fan_out):
    # nn.init.xavier_uniform_: U(-a, a), a = sqrt(6 / (fan_in + fan_out)).
    bound = jnp.sqrt(6.0 / (fan_in + fan_out))
    return jax.random.uniform(key, (fan_in, fan_out), jnp.float32,
                              minval=-bound, maxval=bound)


def init_params(key, input_size, output_size, hidden_sizes=(128, 128)):
    # Weights stored transposed vs. PyTorch: (in, out).  bias.data.fill_(0.01).
    h1 = hidden_sizes[-1]
    hm2 = hidden_sizes[-2]
    ks = jax.random.split(key, 5)
    bias = lambda n: jnp.full((1, n), 0.01, jnp.float32)
    return dict(
        w1=xavier_uniform(ks[0], input_size, hidden_sizes[0]),
        b1=bias(hidden_sizes[0]),
        wvh=xavier_uniform(ks[1], hm2, h1), bvh=bias(h1),
        wv=xavier_uniform(ks[2], h1, 1),    bv=bias(1),
        wah=xavier_uniform(ks[3], hm2, h1), bah=bias(h1),
        wa=xavier_uniform(ks[4], h1, output_size), ba=bias(output_size),
    )
    # TODO(synk): only the default config (relu, len(hidden_sizes)==2,
    # dropout=0.0 / eval mode) is implemented; tanh/sigmoid and deeper trunks
    # would need extra fused layers.


def pack_params(p, num_actions):
    """Fuse the two streams and fold the dueling aggregation into the head."""
    h1 = p["wvh"].shape[1]
    A = num_actions

    # Fused hidden layer: [Wvh | Wah], [bvh | bah].
    wc = jnp.concatenate([p["wvh"], p["wah"]], axis=1)   # (H0, 2*H1)
    bc = jnp.concatenate([p["bvh"], p["bah"]], axis=1)   # (1, 2*H1)

    # Folded head:
    #   q_j = h_v @ Wv + h_a @ (Wa[:,j] - mean_k Wa[:,k]) + ba_j + bv - mean(ba)
    wv_block = jnp.broadcast_to(p["wv"], (h1, A))                      # value rows
    wa_block = p["wa"] - p["wa"].mean(axis=1, keepdims=True)           # advantage rows
    wq = jnp.concatenate([wv_block, wa_block], axis=0)                 # (2*H1, A)
    bq = p["ba"] - p["ba"].mean(axis=1, keepdims=True) + p["bv"]       # (1, A)
    return p["w1"], p["b1"], wc, bc, wq, bq


# ---------------------------------------------------------------------------
# References
# ---------------------------------------------------------------------------

def reference_f32(x, p):
    # Mirrors the PyTorch forward in full f32.
    h = jax.nn.relu(x @ p["w1"] + p["b1"])
    v = jax.nn.relu(h @ p["wvh"] + p["bvh"]) @ p["wv"] + p["bv"]
    a = jax.nn.relu(h @ p["wah"] + p["bah"]) @ p["wa"] + p["ba"]
    return v + a - a.mean(axis=1, keepdims=True)


def reference_bf16(x, w1, b1, wc, bc, wq, bq):
    # Precision-matched reference (bf16 operands, f32 accumulation), same
    # fused/folded weights as the kernel.
    bf = jnp.bfloat16
    h = jnp.maximum(jnp.dot(x.astype(bf), w1.astype(bf),
                            preferred_element_type=jnp.float32) + b1, 0.0)
    hc = jnp.maximum(jnp.dot(h.astype(bf), wc.astype(bf),
                             preferred_element_type=jnp.float32) + bc, 0.0)
    return jnp.dot(hc.astype(bf), wq.astype(bf),
                   preferred_element_type=jnp.float32) + bq


if __name__ == "__main__":
    key = jax.random.PRNGKey(0)
    k_x, k_p = jax.random.split(key)

    batch = 8
    input_size = 32
    output_size = 8
    hidden_sizes = (128, 128)

    x = jax.random.normal(k_x, (batch, input_size), jnp.float32)
    p = init_params(k_p, input_size, output_size, hidden_sizes)
    w1, b1, wc, bc, wq, bq = pack_params(p, output_size)

    out = dueling_mlp(x, w1, b1, wc, bc, wq, bq)
    out = jax.block_until_ready(out)

    assert out.shape == (batch, output_size)

    # Tight check against precision-matched (bf16-operand, folded-weight) ref.
    ref16 = reference_bf16(x, w1, b1, wc, bc, wq, bq)
    assert jnp.allclose(out, ref16, atol=2e-3, rtol=2e-3), \
        "mismatch vs bf16-operand reference"

    # Loose check against the full-f32 module semantics (unfolded params).
    ref32 = reference_f32(x, p)
    assert jnp.allclose(out, ref32, atol=5e-2, rtol=5e-2), \
        "mismatch vs f32 reference"

    print("KERNEL_OK")
</pallas_src>

<mosaic_0001>
module attributes {stable_mosaic.version = 11 : i64} {
  func.func @dueling_kernel(%arg0: i32, %arg1: memref<8x32xbf16, #tpu.memory_space<vmem>>, %arg2: memref<32x128xbf16, #tpu.memory_space<vmem>>, %arg3: memref<1x128xf32, #tpu.memory_space<vmem>>, %arg4: memref<128x256xbf16, #tpu.memory_space<vmem>>, %arg5: memref<1x256xf32, #tpu.memory_space<vmem>>, %arg6: memref<256x8xbf16, #tpu.memory_space<vmem>>, %arg7: memref<1x8xf32, #tpu.memory_space<vmem>>, %arg8: memref<8x8xf32, #tpu.memory_space<vmem>>) attributes {dimension_semantics = [#tpu.dimension_semantics<parallel>], iteration_bounds = array<i64: 1>, scalar_prefetch = 0 : i64, scratch_operands = 0 : i64, tpu.core_type = #tpu.core_type<tc>, window_params = [{transform_indices = @transform_0, window_bounds = array<i64: 8, 32>}, {pipeline_mode = #tpu.pipeline_mode<synchronous>, transform_indices = @transform_1, window_bounds = array<i64: 32, 128>}, {pipeline_mode = #tpu.pipeline_mode<synchronous>, transform_indices = @transform_2, window_bounds = array<i64: 1, 128>}, {pipeline_mode = #tpu.pipeline_mode<synchronous>, transform_indices = @transform_3, window_bounds = array<i64: 128, 256>}, {pipeline_mode = #tpu.pipeline_mode<synchronous>, transform_indices = @transform_4, window_bounds = array<i64: 1, 256>}, {pipeline_mode = #tpu.pipeline_mode<synchronous>, transform_indices = @transform_5, window_bounds = array<i64: 256, 8>}, {pipeline_mode = #tpu.pipeline_mode<synchronous>, transform_indices = @transform_6, window_bounds = array<i64: 1, 8>}, {transform_indices = @transform_7, window_bounds = array<i64: 8, 8>}]} {
    %c0 = arith.constant 0 : index
    %c0_0 = arith.constant 0 : index
    %0 = vector.load %arg1[%c0, %c0_0] : memref<8x32xbf16, #tpu.memory_space<vmem>>, vector<8x32xbf16>
    %c0_1 = arith.constant 0 : index
    %c0_2 = arith.constant 0 : index
    %1 = vector.load %arg2[%c0_1, %c0_2] : memref<32x128xbf16, #tpu.memory_space<vmem>>, vector<32x128xbf16>
    %cst = arith.constant dense<0.000000e+00> : vector<8x128xf32>
    %2 = tpu.matmul %0, %1, %cst {dimension_numbers = #tpu.dot_dimension_numbers<[1], [0], [0], [1], [0, 0, 1, 1], [], []>} : vector<8x32xbf16>, vector<32x128xbf16>, vector<8x128xf32> -> vector<8x128xf32>
    %c0_3 = arith.constant 0 : index
    %c0_4 = arith.constant 0 : index
    %3 = vector.load %arg3[%c0_3, %c0_4] : memref<1x128xf32, #tpu.memory_space<vmem>>, vector<1x128xf32>
    %4 = vector.broadcast %3 : vector<1x128xf32> to vector<8x128xf32>
    %5 = arith.addf %2, %4 : vector<8x128xf32>
    %cst_5 = arith.constant 0.000000e+00 : f32
    %6 = vector.broadcast %cst_5 : f32 to vector<8x128xf32>
    %7 = arith.maximumf %5, %6 : vector<8x128xf32>
    %8 = arith.truncf %7 : vector<8x128xf32> to vector<8x128xbf16>
    %c0_6 = arith.constant 0 : index
    %c0_7 = arith.constant 0 : index
    %9 = vector.load %arg4[%c0_6, %c0_7] : memref<128x256xbf16, #tpu.memory_space<vmem>>, vector<128x256xbf16>
    %cst_8 = arith.constant dense<0.000000e+00> : vector<8x256xf32>
    %10 = tpu.matmul %8, %9, %cst_8 {dimension_numbers = #tpu.dot_dimension_numbers<[1], [0], [0], [1], [0, 0, 1, 1], [], []>} : vector<8x128xbf16>, vector<128x256xbf16>, vector<8x256xf32> -> vector<8x256xf32>
    %c0_9 = arith.constant 0 : index
    %c0_10 = arith.constant 0 : index
    %11 = vector.load %arg5[%c0_9, %c0_10] : memref<1x256xf32, #tpu.memory_space<vmem>>, vector<1x256xf32>
    %12 = vector.broadcast %11 : vector<1x256xf32> to vector<8x256xf32>
    %13 = arith.addf %10, %12 : vector<8x256xf32>
    %cst_11 = arith.constant 0.000000e+00 : f32
    %14 = vector.broadcast %cst_11 : f32 to vector<8x256xf32>
    %15 = arith.maximumf %13, %14 : vector<8x256xf32>
    %16 = arith.truncf %15 : vector<8x256xf32> to vector<8x256xbf16>
    %c0_12 = arith.constant 0 : index
    %c0_13 = arith.constant 0 : index
    %17 = vector.load %arg6[%c0_12, %c0_13] : memref<256x8xbf16, #tpu.memory_space<vmem>>, vector<256x8xbf16>
    %cst_14 = arith.constant dense<0.000000e+00> : vector<8x8xf32>
    %18 = tpu.matmul %16, %17, %cst_14 {dimension_numbers = #tpu.dot_dimension_numbers<[1], [0], [0], [1], [0, 0, 1, 1], [], []>} : vector<8x256xbf16>, vector<256x8xbf16>, vector<8x8xf32> -> vector<8x8xf32>
    %c0_15 = arith.constant 0 : index
    %c0_16 = arith.constant 0 : index
    %19 = vector.load %arg7[%c0_15, %c0_16] : memref<1x8xf32, #tpu.memory_space<vmem>>, vector<1x8xf32>
    %20 = vector.broadcast %19 : vector<1x8xf32> to vector<8x8xf32>
    %21 = arith.addf %18, %20 : vector<8x8xf32>
    %c0_17 = arith.constant 0 : index
    %c0_18 = arith.constant 0 : index
    %22 = vector.load %arg8[%c0_17, %c0_18] : memref<8x8xf32, #tpu.memory_space<vmem>>, vector<8x8xf32>
    tpu.vector_store %arg8[%c0_17, %c0_18], %21 {strides = array<i32>} : memref<8x8xf32, #tpu.memory_space<vmem>>, vector<8x8xf32>,
    return
  }
  func.func @transform_0(%arg0: i32) -> (i32, i32) {
    %c0_i32 = arith.constant 0 : i32
    %c0_i32_0 = arith.constant 0 : i32
    return %arg0, %c0_i32 : i32, i32
  }
  func.func @transform_1(%arg0: i32) -> (i32, i32) {
    %c0_i32 = arith.constant 0 : i32
    %c0_i32_0 = arith.constant 0 : i32
    %c0_i32_1 = arith.constant 0 : i32
    return %c0_i32, %c0_i32_0 : i32, i32
  }
  func.func @transform_2(%arg0: i32) -> (i32, i32) {
    %c0_i32 = arith.constant 0 : i32
    %c0_i32_0 = arith.constant 0 : i32
    %c0_i32_1 = arith.constant 0 : i32
    return %c0_i32, %c0_i32_0 : i32, i32
  }
  func.func @transform_3(%arg0: i32) -> (i32, i32) {
    %c0_i32 = arith.constant 0 : i32
    %c0_i32_0 = arith.constant 0 : i32
    %c0_i32_1 = arith.constant 0 : i32
    return %c0_i32, %c0_i32_0 : i32, i32
  }
  func.func @transform_4(%arg0: i32) -> (i32, i32) {
    %c0_i32 = arith.constant 0 : i32
    %c0_i32_0 = arith.constant 0 : i32
    %c0_i32_1 = arith.constant 0 : i32
    return %c0_i32, %c0_i32_0 : i32, i32
  }
  func.func @transform_5(%arg0: i32) -> (i32, i32) {
    %c0_i32 = arith.constant 0 : i32
    %c0_i32_0 = arith.constant 0 : i32
    %c0_i32_1 = arith.constant 0 : i32
    return %c0_i32, %c0_i32_0 : i32, i32
  }
  func.func @transform_6(%arg0: i32) -> (i32, i32) {
    %c0_i32 = arith.constant 0 : i32
    %c0_i32_0 = arith.constant 0 : i32
    %c0_i32_1 = arith.constant 0 : i32
    return %c0_i32, %c0_i32_0 : i32, i32
  }
  func.func @transform_7(%arg0: i32) -> (i32, i32) {
    %c0_i32 = arith.constant 0 : i32
    %c0_i32_0 = arith.constant 0 : i32
    return %arg0, %c0_i32 : i32, i32
  }
}

</mosaic_0001>

<llo_original>
// kernel: dueling_mlp.1
$region0: #{dueling_mlp.1}
  #allocation0 [shape = 'u32[]', space=smem, size = 0x4, offset = 0x4, fixed_abs, tag = 'smem constant byte address 0x4 - core index']
  #allocation1 [shape = 'u32[144,128]{1,0:T(1,128)}', space=vmem, size = 0x12000, scoped, tag = 'internal scratch']
  %s0 = inlined_call_operand.vmem [shape: bf16[8,32], index: 0, kind: input, shape index: {}]
  %s1 = inlined_call_operand.vmem [shape: bf16[32,128], index: 1, kind: input, shape index: {}]
  %s2 = inlined_call_operand.vmem [shape: f32[1,128], index: 2, kind: input, shape index: {}]
  %s3 = inlined_call_operand.vmem [shape: bf16[128,256], index: 3, kind: input, shape index: {}]
  %s4 = inlined_call_operand.vmem [shape: f32[1,256], index: 4, kind: input, shape index: {}]
  %s5 = inlined_call_operand.vmem [shape: bf16[256,8], index: 5, kind: input, shape index: {}]
  %s6 = inlined_call_operand.vmem [shape: f32[1,8], index: 6, kind: input, shape index: {}]
  %s7 = inlined_call_operand.hbm [shape: f32[8,8], index: 7, kind: output, shape index: {}]
  %s8 = sld [smem:[#allocation0]]
  $region38: #{dueling_mlp.1} parent=0
    _
  %s10 = ssub.s32 1, %s8
  %s11 = scalar_select 0, %s10, %s8
  $region1: #{dueling_mlp.1} parent=0
    #allocation2 [shape = 'u8[4096]{0}', space=vmem, size = 0x1000, scoped, tag = 'output window, operand 0, single buffered']
    #allocation3 [shape = 's32[1]{0}', space=sflag, size = 0x4, scoped, tag = 'scoped memory for dueling_mlp.1']
    %12 = vsyncpa [#allocation3], 0
    // Predicated region
    $region2: #{dueling_mlp.1} parent=1 // pred_check
      _
    $region3: #{dueling_mlp.1} parent=1 // pred_check_branch
      %14 = sbr.rel (0) target = $region5
    $region4: #{dueling_mlp.1} parent=1 // pred_region
      _
    $region5: #{dueling_mlp.1} parent=1 // pred_fallthru
      _
    // Predicated region
    $region6: #{dueling_mlp.1} parent=1 // pred_check
      _
    $region7: #{dueling_mlp.1} parent=1 // pred_check_branch
      %16 = sbr.rel (0) target = $region9
    $region8: #{dueling_mlp.1} parent=1 // pred_region
      _
    $region9: #{dueling_mlp.1} parent=1 // pred_fallthru
      _
    // Predicated region
    $region10: #{dueling_mlp.1} parent=1 // pred_check
      _
    $region11: #{dueling_mlp.1} parent=1 // pred_check_branch
      %18 = sbr.rel (0) target = $region13
    $region12: #{dueling_mlp.1} parent=1 // pred_region
      _
    $region13: #{dueling_mlp.1} parent=1 // pred_fallthru
      _
    // Predicated region
    $region14: #{dueling_mlp.1} parent=1 // pred_check
      _
    $region15: #{dueling_mlp.1} parent=1 // pred_check_branch
      %20 = sbr.rel (0) target = $region17
    $region16: #{dueling_mlp.1} parent=1 // pred_region
      _
    $region17: #{dueling_mlp.1} parent=1 // pred_fallthru
      _
    // Predicated region
    $region18: #{dueling_mlp.1} parent=1 // pred_check
      _
    $region19: #{dueling_mlp.1} parent=1 // pred_check_branch
      %22 = sbr.rel (0) target = $region21
    $region20: #{dueling_mlp.1} parent=1 // pred_region
      _
    $region21: #{dueling_mlp.1} parent=1 // pred_fallthru
      _
    // Predicated region
    $region22: #{dueling_mlp.1} parent=1 // pred_check
      _
    $region23: #{dueling_mlp.1} parent=1 // pred_check_branch
      %24 = sbr.rel (0) target = $region25
    $region24: #{dueling_mlp.1} parent=1 // pred_region
      _
    $region25: #{dueling_mlp.1} parent=1 // pred_fallthru
      _
    // Predicated region
    $region26: #{dueling_mlp.1} parent=1 // pred_check
      _
    $region27: #{dueling_mlp.1} parent=1 // pred_check_branch
      %26 = sbr.rel (0) target = $region29
    $region28: #{dueling_mlp.1} parent=1 // pred_region
      _
    $region29: #{dueling_mlp.1} parent=1 // pred_fallthru
      _
    %v28 = vld [vmem:[%s0] sm:$0xf]
    %v29 = vld [vmem:[%s1] sm:$0xf]
    %v30 = vld [vmem:[%s1 + $0x4] sm:$0xf]
    %v31 = vld [vmem:[%s1 + $0x8] sm:$0xf]
    %v32 = vld [vmem:[%s1 + $0xc] sm:$0xf]
    %v33 = vld [vmem:[%s2] sm:$0x1]
    %v35 = vlaneseq
    %v36 = vshrl.u32 %v35, 7
    %v37 = vsub.s32 0, %v36
    %v38 = vrot.slane %v33, %v37
    %v44 = vunpack.c.l.b16 %v29
    %v45 = vunpack.c.l.b16 %v30
    %v46 = vunpack.c.l.b16 %v31
    %v47 = vunpack.c.l.b16 %v32
    %v48 = vpack.c.b16 %v45, %v44
    %v49 = vpack.c.b16 %v47, %v46
    %vm52 = vcmask 261120
    %v54 = vsel %vm52, %v28, 0
    %56 = vmatprep.subr.bf16.mxu0 0
    %57 = vmatpush1.bf16.msra.mxu0 %v48
    %58 = vmatprep.subr.bf16.mxu0 0
    %59 = vmatpush1.bf16.msra.mxu0 %v49
    %60 = vmatprep.subr.bf16.mxu0 0
    %61 = vmatpush1.bf16.msra.mxu0 0
    %62 = vmatprep.subr.bf16.mxu0 0
    %63 = vmatpush1.bf16.msra.mxu0 0
    %64 = vmatprep.subr.bf16.mxu0 0
    %65 = vmatpush1.bf16.msra.mxu0 0
    %66 = vmatprep.subr.bf16.mxu0 0
    %67 = vmatpush1.bf16.msra.mxu0 0
    %68 = vmatprep.subr.bf16.mxu0 0
    %69 = vmatpush1.bf16.msra.mxu0 0
    %70 = vmatprep.subr.bf16.mxu0 0
    %71 = vmatpush1.bf16.msra.mxu0 0
    %72 = vmatprep.subr.bf16.mxu0 0
    %73 = vmatpush1.bf16.msra.mxu0 0
    %74 = vmatprep.subr.bf16.mxu0 0
    %75 = vmatpush1.bf16.msra.mxu0 0
    %76 = vmatprep.subr.bf16.mxu0 0
    %77 = vmatpush1.bf16.msra.mxu0 0
    %78 = vmatprep.subr.bf16.mxu0 0
    %79 = vmatpush1.bf16.msra.mxu0 0
    %80 = vmatprep.subr.bf16.mxu0 0
    %81 = vmatpush1.bf16.msra.mxu0 0
    %82 = vmatprep.subr.bf16.mxu0 0
    %83 = vmatpush1.bf16.msra.mxu0 0
    %84 = vmatprep.subr.bf16.mxu0 0
    %85 = vmatpush1.bf16.msra.mxu0 0
    %86 = vmatprep.subr.bf16.mxu0 0
    %87 = vmatpush1.bf16.msra.mxu0 0
    %88 = vmatprep.mubr.bf16.mxu0 0
    %89 = vmatmul.mubr.bf16.gmra.mrb[0].mxu0 %v54
    %v90 = vpop.f32.mrb[0].mxu0
    %v91 = vadd.f32 %v38, %v90
    %v92 = vpop.f32.mrb[0].mxu0
    %v93 = vpop.f32.mrb[0].mxu0
    %v94 = vpop.f32.mrb[0].mxu0
    %95 = vdwg.mxu0
    %v96 = vmax.f32 %v91, 0.0
    %v97 = vpack.c.bf16 %v96, %v96
    %v98 = vld [vmem:[%s3] sm:$0xff]
    %v99 = vld [vmem:[%s3 + $0x8] sm:$0xff]
    %v100 = vld [vmem:[%s3 + $0x10] sm:$0xff]
    %v101 = vld [vmem:[%s3 + $0x18] sm:$0xff]
    %v102 = vld [vmem:[%s3 + $0x20] sm:$0xff]
    %v103 = vld [vmem:[%s3 + $0x28] sm:$0xff]
    %v104 = vld [vmem:[%s3 + $0x30] sm:$0xff]
    %v105 = vld [vmem:[%s3 + $0x38] sm:$0xff]
    %v106 = vld [vmem:[%s3 + $0x40] sm:$0xff]
    %v107 = vld [vmem:[%s3 + $0x48] sm:$0xff]
    %v108 = vld [vmem:[%s3 + $0x50] sm:$0xff]
    %v109 = vld [vmem:[%s3 + $0x58] sm:$0xff]
    %v110 = vld [vmem:[%s3 + $0x60] sm:$0xff]
    %v111 = vld [vmem:[%s3 + $0x68] sm:$0xff]
    %v112 = vld [vmem:[%s3 + $0x70] sm:$0xff]
    %v113 = vld [vmem:[%s3 + $0x78] sm:$0xff]
    %v114 = vld [vmem:[%s4] sm:$0x3]
    %v116 = vlaneseq
    %v117 = vshrl.u32 %v116, 7
    %v118 = vsub.s32 0, %v117
    %v119 = vrot.slane %v114, %v118
    %v120 = vlaneseq
    %v121 = vshrl.u32 %v120, 7
    %v122 = vsub.s32 1, %v121
    %v123 = vrot.slane %v114, %v122
    %v142 = vunpack.c.l.b16 %v98
    %v143 = vunpack.c.h.b16 %v98
    %v144 = vunpack.c.l.b16 %v99
    %v145 = vunpack.c.h.b16 %v99
    %v146 = vunpack.c.l.b16 %v100
    %v147 = vunpack.c.h.b16 %v100
    %v148 = vunpack.c.l.b16 %v101
    %v149 = vunpack.c.h.b16 %v101
    %v150 = vunpack.c.l.b16 %v102
    %v151 = vunpack.c.h.b16 %v102
    %v152 = vunpack.c.l.b16 %v103
    %v153 = vunpack.c.h.b16 %v103
    %v154 = vunpack.c.l.b16 %v104
    %v155 = vunpack.c.h.b16 %v104
    %v156 = vunpack.c.l.b16 %v105
    %v157 = vunpack.c.h.b16 %v105
    %v158 = vunpack.c.l.b16 %v106
    %v159 = vunpack.c.h.b16 %v106
    %v160 = vunpack.c.l.b16 %v107
    %v161 = vunpack.c.h.b16 %v107
    %v162 = vunpack.c.l.b16 %v108
    %v163 = vunpack.c.h.b16 %v108
    %v164 = vunpack.c.l.b16 %v109
    %v165 = vunpack.c.h.b16 %v109
    %v166 = vunpack.c.l.b16 %v110
    %v167 = vunpack.c.h.b16 %v110
    %v168 = vunpack.c.l.b16 %v111
    %v169 = vunpack.c.h.b16 %v111
    %v170 = vunpack.c.l.b16 %v112
    %v171 = vunpack.c.h.b16 %v112
    %v172 = vunpack.c.l.b16 %v113
    %v173 = vunpack.c.h.b16 %v113
    %v174 = vpack.c.b16 %v144, %v142
    %v175 = vpack.c.b16 %v145, %v143
    %v176 = vpack.c.b16 %v148, %v146
    %v177 = vpack.c.b16 %v149, %v147
    %v178 = vpack.c.b16 %v152, %v150
    %v179 = vpack.c.b16 %v153, %v151
    %v180 = vpack.c.b16 %v156, %v154
    %v181 = vpack.c.b16 %v157, %v155
    %v182 = vpack.c.b16 %v160, %v158
    %v183 = vpack.c.b16 %v161, %v159
    %v184 = vpack.c.b16 %v164, %v162
    %v185 = vpack.c.b16 %v165, %v163
    %v186 = vpack.c.b16 %v168, %v166
    %v187 = vpack.c.b16 %v169, %v167
    %v188 = vpack.c.b16 %v172, %v170
    %v189 = vpack.c.b16 %v173, %v171
    %206 = vmatprep.subr.bf16.mxu0 %v175
    %207 = vmatpush1.bf16.msra.mxu0 %v174
    %208 = vmatprep.subr.bf16.mxu0 %v177
    %209 = vmatpush1.bf16.msra.mxu0 %v176
    %210 = vmatprep.subr.bf16.mxu0 %v179
    %211 = vmatpush1.bf16.msra.mxu0 %v178
    %212 = vmatprep.subr.bf16.mxu0 %v181
    %213 = vmatpush1.bf16.msra.mxu0 %v180
    %214 = vmatprep.subr.bf16.mxu0 %v183
    %215 = vmatpush1.bf16.msra.mxu0 %v182
    %216 = vmatprep.subr.bf16.mxu0 %v185
    %217 = vmatpush1.bf16.msra.mxu0 %v184
    %218 = vmatprep.subr.bf16.mxu0 %v187
    %219 = vmatpush1.bf16.msra.mxu0 %v186
    %220 = vmatprep.subr.bf16.mxu0 %v189
    %221 = vmatpush1.bf16.msra.mxu0 %v188
    %222 = vmatprep.subr.bf16.mxu0 0
    %223 = vmatpush1.bf16.msra.mxu0 0
    %224 = vmatprep.subr.bf16.mxu0 0
    %225 = vmatpush1.bf16.msra.mxu0 0
    %226 = vmatprep.subr.bf16.mxu0 0
    %227 = vmatpush1.bf16.msra.mxu0 0
    %228 = vmatprep.subr.bf16.mxu0 0
    %229 = vmatpush1.bf16.msra.mxu0 0
    %230 = vmatprep.subr.bf16.mxu0 0
    %231 = vmatpush1.bf16.msra.mxu0 0
    %232 = vmatprep.subr.bf16.mxu0 0
    %233 = vmatpush1.bf16.msra.mxu0 0
    %234 = vmatprep.subr.bf16.mxu0 0
    %235 = vmatpush1.bf16.msra.mxu0 0
    %236 = vmatprep.subr.bf16.mxu0 0
    %237 = vmatpush1.bf16.msra.mxu0 0
    %238 = vmatprep.mubr.bf16.mxu0 0
    %239 = vmatmul.mubr.bf16.gmra.mrb[0].mxu0 %v97
    %v240 = vpop.f32.mrb[0].mxu0
    %v241 = vadd.f32 %v119, %v240
    %v242 = vpop.f32.mrb[0].mxu0
    %v243 = vadd.f32 %v123, %v242
    %v244 = vpop.f32.mrb[0].mxu0
    %v245 = vpop.f32.mrb[0].mxu0
    %246 = vdwg.mxu0
    %v247 = vmax.f32 %v241, 0.0
    %v248 = vmax.f32 %v243, 0.0
    %v249 = vpack.c.bf16 %v247, %v247
    %v250 = vpack.c.bf16 %v248, %v248
    %v251 = vld [vmem:[%s5] sm:$0xf]
    %v252 = vld [vmem:[%s5 + $0x4] sm:$0xf]
    %v253 = vld [vmem:[%s5 + $0x8] sm:$0xf]
    %v254 = vld [vmem:[%s5 + $0xc] sm:$0xf]
    %v255 = vld [vmem:[%s5 + $0x10] sm:$0xf]
    %v256 = vld [vmem:[%s5 + $0x14] sm:$0xf]
    %v257 = vld [vmem:[%s5 + $0x18] sm:$0xf]
    %v258 = vld [vmem:[%s5 + $0x1c] sm:$0xf]
    %v259 = vld [vmem:[%s5 + $0x20] sm:$0xf]
    %v260 = vld [vmem:[%s5 + $0x24] sm:$0xf]
    %v261 = vld [vmem:[%s5 + $0x28] sm:$0xf]
    %v262 = vld [vmem:[%s5 + $0x2c] sm:$0xf]
    %v263 = vld [vmem:[%s5 + $0x30] sm:$0xf]
    %v264 = vld [vmem:[%s5 + $0x34] sm:$0xf]
    %v265 = vld [vmem:[%s5 + $0x38] sm:$0xf]
    %v266 = vld [vmem:[%s5 + $0x3c] sm:$0xf]
    %v267 = vld [vmem:[%s5 + $0x40] sm:$0xf]
    %v268 = vld [vmem:[%s5 + $0x44] sm:$0xf]
    %v269 = vld [vmem:[%s5 + $0x48] sm:$0xf]
    %v270 = vld [vmem:[%s5 + $0x4c] sm:$0xf]
    %v271 = vld [vmem:[%s5 + $0x50] sm:$0xf]
    %v272 = vld [vmem:[%s5 + $0x54] sm:$0xf]
    %v273 = vld [vmem:[%s5 + $0x58] sm:$0xf]
    %v274 = vld [vmem:[%s5 + $0x5c] sm:$0xf]
    %v275 = vld [vmem:[%s5 + $0x60] sm:$0xf]
    %v276 = vld [vmem:[%s5 + $0x64] sm:$0xf]
    %v277 = vld [vmem:[%s5 + $0x68] sm:$0xf]
    %v278 = vld [vmem:[%s5 + $0x6c] sm:$0xf]
    %v279 = vld [vmem:[%s5 + $0x70] sm:$0xf]
    %v280 = vld [vmem:[%s5 + $0x74] sm:$0xf]
    %v281 = vld [vmem:[%s5 + $0x78] sm:$0xf]
    %v282 = vld [vmem:[%s5 + $0x7c] sm:$0xf]
    %v283 = vld [vmem:[%s6] sm:$0x1]
    %v285 = vlaneseq
    %v286 = vshrl.u32 %v285, 7
    %v287 = vsub.s32 0, %v286
    %v288 = vrot.slane %v283, %v287
    %v322 = vunpack.c.l.b16 %v251
    %v323 = vunpack.c.l.b16 %v252
    %v324 = vunpack.c.l.b16 %v253
    %v325 = vunpack.c.l.b16 %v254
    %v326 = vunpack.c.l.b16 %v255
    %v327 = vunpack.c.l.b16 %v256
    %v328 = vunpack.c.l.b16 %v257
    %v329 = vunpack.c.l.b16 %v258
    %v330 = vunpack.c.l.b16 %v259
    %v331 = vunpack.c.l.b16 %v260
    %v332 = vunpack.c.l.b16 %v261
    %v333 = vunpack.c.l.b16 %v262
    %v334 = vunpack.c.l.b16 %v263
    %v335 = vunpack.c.l.b16 %v264
    %v336 = vunpack.c.l.b16 %v265
    %v337 = vunpack.c.l.b16 %v266
    %v338 = vunpack.c.l.b16 %v267
    %v339 = vunpack.c.l.b16 %v268
    %v340 = vunpack.c.l.b16 %v269
    %v341 = vunpack.c.l.b16 %v270
    %v342 = vunpack.c.l.b16 %v271
    %v343 = vunpack.c.l.b16 %v272
    %v344 = vunpack.c.l.b16 %v273
    %v345 = vunpack.c.l.b16 %v274
    %v346 = vunpack.c.l.b16 %v275
    %v347 = vunpack.c.l.b16 %v276
    %v348 = vunpack.c.l.b16 %v277
    %v349 = vunpack.c.l.b16 %v278
    %v350 = vunpack.c.l.b16 %v279
    %v351 = vunpack.c.l.b16 %v280
    %v352 = vunpack.c.l.b16 %v281
    %v353 = vunpack.c.l.b16 %v282
    %v354 = vpack.c.b16 %v323, %v322
    %v355 = vpack.c.b16 %v325, %v324
    %v356 = vpack.c.b16 %v327, %v326
    %v357 = vpack.c.b16 %v329, %v328
    %v358 = vpack.c.b16 %v331, %v330
    %v359 = vpack.c.b16 %v333, %v332
    %v360 = vpack.c.b16 %v335, %v334
    %v361 = vpack.c.b16 %v337, %v336
    %v362 = vpack.c.b16 %v339, %v338
    %v363 = vpack.c.b16 %v341, %v340
    %v364 = vpack.c.b16 %v343, %v342
    %v365 = vpack.c.b16 %v345, %v344
    %v366 = vpack.c.b16 %v347, %v346
    %v367 = vpack.c.b16 %v349, %v348
    %v368 = vpack.c.b16 %v351, %v350
    %v369 = vpack.c.b16 %v353, %v352
    %386 = vmatprep.subr.bf16.mxu0 0
    %387 = vmatpush1.bf16.msra.mxu0 %v354
    %388 = vmatprep.subr.bf16.mxu0 0
    %389 = vmatpush1.bf16.msra.mxu0 %v355
    %390 = vmatprep.subr.bf16.mxu0 0
    %391 = vmatpush1.bf16.msra.mxu0 %v356
    %392 = vmatprep.subr.bf16.mxu0 0
    %393 = vmatpush1.bf16.msra.mxu0 %v357
    %394 = vmatprep.subr.bf16.mxu0 0
    %395 = vmatpush1.bf16.msra.mxu0 %v358
    %396 = vmatprep.subr.bf16.mxu0 0
    %397 = vmatpush1.bf16.msra.mxu0 %v359
    %398 = vmatprep.subr.bf16.mxu0 0
    %399 = vmatpush1.bf16.msra.mxu0 %v360
    %400 = vmatprep.subr.bf16.mxu0 0
    %401 = vmatpush1.bf16.msra.mxu0 %v361
    %402 = vmatprep.subr.bf16.mxu0 0
    %403 = vmatpush1.bf16.msra.mxu0 %v362
    %404 = vmatprep.subr.bf16.mxu0 0
    %405 = vmatpush1.bf16.msra.mxu0 %v363
    %406 = vmatprep.subr.bf16.mxu0 0
    %407 = vmatpush1.bf16.msra.mxu0 %v364
    %408 = vmatprep.subr.bf16.mxu0 0
    %409 = vmatpush1.bf16.msra.mxu0 %v365
    %410 = vmatprep.subr.bf16.mxu0 0
    %411 = vmatpush1.bf16.msra.mxu0 %v366
    %412 = vmatprep.subr.bf16.mxu0 0
    %413 = vmatpush1.bf16.msra.mxu0 %v367
    %414 = vmatprep.subr.bf16.mxu0 0
    %415 = vmatpush1.bf16.msra.mxu0 %v368
    %416 = vmatprep.subr.bf16.mxu0 0
    %417 = vmatpush1.bf16.msra.mxu0 %v369
    %418 = vmatprep.mubr.bf16.mxu0 %v250
    %419 = vmatmul.mubr.bf16.gmra.mrb[0].mxu0 %v249
    %v420 = vpop.f32.mrb[0].mxu0
    %v421 = vadd.f32 %v288, %v420
    %v422 = vpop.f32.mrb[0].mxu0
    %v423 = vpop.f32.mrb[0].mxu0
    %v424 = vpop.f32.mrb[0].mxu0
    %425 = vdwg.mxu0
    %vm426 = vcmask 64512
    %427 = vst.msk [vmem:[#allocation2] sm:$0xff] %vm426, %v421
    // Predicated region
    $region30: #{dueling_mlp.1} parent=1 // pred_check
      _
    $region31: #{dueling_mlp.1} parent=1 // pred_check_branch
      %429 = sbr.rel (0) target = $region33
    $region32: #{dueling_mlp.1} parent=1 // pred_region
      %s431 = ssub.s32 128, 128
      %432 = vsyncadd [#allocation3], %s431
      %s434 = sshll.u32 [#allocation2], 4
      %s435 = int_to_ptr.vmem [resolvable:$true] %s434
      %437 = dma.vmem_to_hbm [thread:$0]  %s435, 128, %s7, [#allocation3]
    $region33: #{dueling_mlp.1} parent=1 // pred_fallthru
      _
    // Predicated region
    $region34: #{dueling_mlp.1} parent=1 // pred_check
      _
    $region35: #{dueling_mlp.1} parent=1 // pred_check_branch
      %439 = sbr.rel (0) target = $region37
    $region36: #{dueling_mlp.1} parent=1 // pred_region
      %440 = dma.done [#allocation3], 128
    $region37: #{dueling_mlp.1} parent=1 // pred_fallthru
      _
    %441 = vsyncpa [#allocation3], 1

</llo_original>
